<compile_context>
chip_gen: v7x
topology: tpu7x:2x2x1
jax: 0.10.0
libtpu: 0.0.40
codegen_flags: <defaults>
</compile_context>

<pallas_src>
import functools

import jax
import jax.numpy as jnp
from jax.experimental import pallas as pl
from jax.experimental.pallas import tpu as pltpu


# ---------------------------------------------------------------------------
# Pallas kernel: single-pass affine tile  y = x @ W + b
# ---------------------------------------------------------------------------
def _linear_kernel(x_ref, w_ref, b_ref, o_ref):
    """One (tm, tn) output tile; full K in a single MXU pass, f32 accumulate."""
    o_ref[...] = (
        jnp.dot(x_ref[...], w_ref[...], preferred_element_type=jnp.float32)
        + b_ref[...]
    ).astype(o_ref.dtype)


def pallas_linear(x, w, b, *, tm=512, tn=256, out_dtype=jnp.float32):
    """y = x @ w + b.

    x: (M, K) bf16, w: (K, N) bf16, b: (N,) f32  ->  (M, N) out_dtype.
    K is kept whole (single MXU pass per tile); M/N tiles clamp to the array
    extents and must divide them evenly.
    """
    m, k_dim = x.shape
    k2, n = w.shape
    assert k_dim == k2, (x.shape, w.shape)

    tm = min(tm, m)
    tn = min(tn, n)
    assert m % tm == 0 and n % tn == 0, (m, n, tm, tn)
    # TODO(synk): for very large K (K*tn bf16 tiles no longer VMEM-friendly),
    # reintroduce an innermost K grid axis with an f32 accumulator.

    b2d = b.astype(jnp.float32).reshape(1, n)

    gm, gn = m // tm, n // tn
    # Only shard across TensorCores when an axis actually has multiple tiles.
    semantics = tuple("parallel" if g > 1 else "arbitrary" for g in (gm, gn))

    return pl.pallas_call(
        _linear_kernel,
        out_shape=jax.ShapeDtypeStruct((m, n), out_dtype),
        grid=(gm, gn),
        in_specs=[
            pl.BlockSpec((tm, k_dim), lambda i, j: (i, 0)),
            pl.BlockSpec((k_dim, tn), lambda i, j: (0, j)),
            pl.BlockSpec((1, tn), lambda i, j: (0, j)),
        ],
        out_specs=pl.BlockSpec((tm, tn), lambda i, j: (i, j)),
        compiler_params=pltpu.CompilerParams(
            dimension_semantics=semantics,
            vmem_limit_bytes=32 * 1024 * 1024,  # within v7x's 64 MiB physical
        ),
    )(x, w, b2d)


@jax.jit
def linear_block(x, w_bf16, b):
    """The wrapped block: one fused GEMM over all (batch*time) rows.

    x: (batch, seq, D_IN) f32 -> (batch, seq, D_OUT) f32.  The reshape + bf16
    cast of x fuses under jit; W is already bf16 (cast once at init time).
    """
    lead = x.shape[:-1]
    d_in = x.shape[-1]
    x2d = x.reshape(-1, d_in).astype(jnp.bfloat16)
    y = pallas_linear(x2d, w_bf16, b)
    return y.reshape(*lead, w_bf16.shape[1])


# ---------------------------------------------------------------------------
# ReccableWrap: same forward semantics as the PyTorch module
# ---------------------------------------------------------------------------
class Reccable:
    """Accepts mask_t and t in its forward kwargs."""


class ReccableWrap(Reccable):
    def __init__(self, block):
        self.block = block

    def __call__(self, *args, **kwargs):
        # forward(): drop the recurrent kwargs, delegate everything else.
        if "mask_t" in kwargs:
            del kwargs["mask_t"]
        if "t" in kwargs:
            del kwargs["t"]
        ret = self.block(*args, **kwargs)
        return ret


# ---------------------------------------------------------------------------
# main
# ---------------------------------------------------------------------------
if __name__ == "__main__":
    key = jax.random.PRNGKey(0)
    k_x, k_w, k_b = jax.random.split(key, 3)

    # batch=2, seq=8 rows fused into one GEMM; lane-dense hidden dims.
    BATCH, SEQ = 2, 8
    D_IN, D_OUT = 256, 256

    x = jax.random.normal(k_x, (BATCH, SEQ, D_IN), dtype=jnp.float32)
    # Deterministic parameter init (synthetic weights, no checkpoint load).
    w = jax.random.normal(k_w, (D_IN, D_OUT), dtype=jnp.float32) * 0.1
    b = jax.random.normal(k_b, (D_OUT,), dtype=jnp.float32) * 0.1

    # Cast W to bf16 ONCE (init-time), not per forward call.
    w_bf16 = w.astype(jnp.bfloat16)

    # The wrapped block: the whole-sequence linear layer running in Pallas.
    block = functools.partial(linear_block, w_bf16=w_bf16, b=b)
    wrapped = ReccableWrap(block)

    # Call with mask_t / t kwargs to exercise the wrapper's kwarg stripping
    # (they are discarded, matching ReccableWrap semantics).
    mask_t = jnp.ones((BATCH,), dtype=jnp.float32)
    out = wrapped(x, mask_t=mask_t, t=3)
    out = jax.block_until_ready(out)

    # Reference along the same bf16-input / f32-accumulate path.
    ref = (
        jnp.dot(
            x.reshape(-1, D_IN).astype(jnp.bfloat16),
            w_bf16,
            preferred_element_type=jnp.float32,
        )
        + b
    ).reshape(BATCH, SEQ, D_OUT)

    assert out.shape == (BATCH, SEQ, D_OUT)
    assert jnp.allclose(out, ref, atol=1e-3, rtol=1e-3), float(
        jnp.max(jnp.abs(out - ref))
    )

    print("KERNEL_OK")
</pallas_src>

<mosaic_0001>
module attributes {stable_mosaic.version = 11 : i64} {
  func.func @_linear_kernel(%arg0: i32, %arg1: i32, %arg2: memref<16x256xbf16, #tpu.memory_space<vmem>>, %arg3: memref<256x256xbf16, #tpu.memory_space<vmem>>, %arg4: memref<1x256xf32, #tpu.memory_space<vmem>>, %arg5: memref<16x256xf32, #tpu.memory_space<vmem>>) attributes {dimension_semantics = [#tpu.dimension_semantics<arbitrary>, #tpu.dimension_semantics<arbitrary>], iteration_bounds = array<i64: 1, 1>, scalar_prefetch = 0 : i64, scratch_operands = 0 : i64, tpu.core_type = #tpu.core_type<tc>, window_params = [{transform_indices = @transform_0, window_bounds = array<i64: 16, 256>}, {transform_indices = @transform_1, window_bounds = array<i64: 256, 256>}, {transform_indices = @transform_2, window_bounds = array<i64: 1, 256>}, {transform_indices = @transform_3, window_bounds = array<i64: 16, 256>}]} {
    %c0 = arith.constant 0 : index
    %c0_0 = arith.constant 0 : index
    %0 = vector.load %arg2[%c0, %c0_0] : memref<16x256xbf16, #tpu.memory_space<vmem>>, vector<16x256xbf16>
    %c0_1 = arith.constant 0 : index
    %c0_2 = arith.constant 0 : index
    %1 = vector.load %arg3[%c0_1, %c0_2] : memref<256x256xbf16, #tpu.memory_space<vmem>>, vector<256x256xbf16>
    %cst = arith.constant dense<0.000000e+00> : vector<16x256xf32>
    %2 = tpu.matmul %0, %1, %cst {dimension_numbers = #tpu.dot_dimension_numbers<[1], [0], [0], [1], [0, 0, 1, 1], [], []>} : vector<16x256xbf16>, vector<256x256xbf16>, vector<16x256xf32> -> vector<16x256xf32>
    %c0_3 = arith.constant 0 : index
    %c0_4 = arith.constant 0 : index
    %3 = vector.load %arg4[%c0_3, %c0_4] : memref<1x256xf32, #tpu.memory_space<vmem>>, vector<1x256xf32>
    %4 = vector.broadcast %3 : vector<1x256xf32> to vector<16x256xf32>
    %5 = arith.addf %2, %4 : vector<16x256xf32>
    %c0_5 = arith.constant 0 : index
    %c0_6 = arith.constant 0 : index
    %6 = vector.load %arg5[%c0_5, %c0_6] : memref<16x256xf32, #tpu.memory_space<vmem>>, vector<16x256xf32>
    tpu.vector_store %arg5[%c0_5, %c0_6], %5 {strides = array<i32>} : memref<16x256xf32, #tpu.memory_space<vmem>>, vector<16x256xf32>,
    return
  }
  func.func @transform_0(%arg0: i32, %arg1: i32) -> (i32, i32) {
    %c0_i32 = arith.constant 0 : i32
    %c0_i32_0 = arith.constant 0 : i32
    return %arg0, %c0_i32 : i32, i32
  }
  func.func @transform_1(%arg0: i32, %arg1: i32) -> (i32, i32) {
    %c0_i32 = arith.constant 0 : i32
    %c0_i32_0 = arith.constant 0 : i32
    return %c0_i32, %arg1 : i32, i32
  }
  func.func @transform_2(%arg0: i32, %arg1: i32) -> (i32, i32) {
    %c0_i32 = arith.constant 0 : i32
    %c0_i32_0 = arith.constant 0 : i32
    return %c0_i32, %arg1 : i32, i32
  }
  func.func @transform_3(%arg0: i32, %arg1: i32) -> (i32, i32) {
    %c0_i32 = arith.constant 0 : i32
    return %arg0, %arg1 : i32, i32
  }
}

</mosaic_0001>

<llo_original>
// kernel: linear_block.1
$region0: #{linear_block.1}
  #allocation0 [shape = 'u32[]', space=smem, size = 0x4, offset = 0x4, fixed_abs, tag = 'smem constant byte address 0x4 - core index']
  #allocation1 [shape = 'u32[144,128]{1,0:T(1,128)}', space=vmem, size = 0x12000, scoped, tag = 'internal scratch']
  %s0 = inlined_call_operand.vmem [shape: bf16[16,256], index: 0, kind: input, shape index: {}]
  %s1 = inlined_call_operand.hbm [shape: bf16[256,256], index: 1, kind: input, shape index: {}]
  %s2 = inlined_call_operand.vmem [shape: f32[1,256], index: 2, kind: input, shape index: {}]
  %s3 = inlined_call_operand.hbm [shape: f32[16,256], index: 3, kind: output, shape index: {}]
  %s4 = sld [smem:[#allocation0]]
  $region26: #{linear_block.1} parent=0
    _
  %s6 = ssub.s32 1, %s4
  %s7 = scalar_select 0, %s6, %s4
  $region1: #{linear_block.1} parent=0
    #allocation2 [shape = 'u8[131072]{0}', space=vmem, size = 0x20000, scoped, tag = 'input window, operand 1, single buffered']
    #allocation3 [shape = 's32[1]{0}', space=sflag, size = 0x4, scoped, tag = 'scoped memory for linear_block.1']
    #allocation4 [shape = 's32[1]{0}', space=sflag, size = 0x4, scoped, tag = 'scoped memory for linear_block.1']
    #allocation5 [shape = 'u8[16384]{0}', space=vmem, size = 0x4000, scoped, tag = 'output window, operand 0, single buffered']
    %8 = vsyncpa [#allocation3], 0
    %9 = vsyncpa [#allocation4], 0
    // Predicated region
    $region2: #{linear_block.1} parent=1 // pred_check
      _
    $region3: #{linear_block.1} parent=1 // pred_check_branch
      %11 = sbr.rel (0) target = $region5
    $region4: #{linear_block.1} parent=1 // pred_region
      _
    $region5: #{linear_block.1} parent=1 // pred_fallthru
      _
    // Predicated region
    $region6: #{linear_block.1} parent=1 // pred_check
      _
    $region7: #{linear_block.1} parent=1 // pred_check_branch
      %13 = sbr.rel (0) target = $region9
    $region8: #{linear_block.1} parent=1 // pred_region
      %s15 = ssub.s32 4096, 4096
      %16 = vsyncadd [#allocation3], %s15
      %s17 = sshll.u32 [#allocation2], 4
      %s18 = int_to_ptr.vmem [resolvable:$true] %s17
      %23 = dma.hbm_to_vmem [thread:$0]  %s1, 4096, %s18, [#allocation3], 128, 128, 8
    $region9: #{linear_block.1} parent=1 // pred_fallthru
      _
    // Predicated region
    $region10: #{linear_block.1} parent=1 // pred_check
      _
    $region11: #{linear_block.1} parent=1 // pred_check_branch
      %25 = sbr.rel (0) target = $region13
    $region12: #{linear_block.1} parent=1 // pred_region
      _
    $region13: #{linear_block.1} parent=1 // pred_fallthru
      _
    // Predicated region
    $region14: #{linear_block.1} parent=1 // pred_check
      _
    $region15: #{linear_block.1} parent=1 // pred_check_branch
      %27 = sbr.rel (0) target = $region17
    $region16: #{linear_block.1} parent=1 // pred_region
      %28 = dma.done [#allocation3], 4096
    $region17: #{linear_block.1} parent=1 // pred_fallthru
      _
    %v29 = vld [vmem:[%s0] sm:$0xff]
    %v30 = vld [vmem:[%s0 + $0x8] sm:$0xff]
    %v31 = vld [vmem:[#allocation2] sm:$0xff]
    %v32 = vld [vmem:[#allocation2 + $0x8] sm:$0xff]
    %v33 = vld [vmem:[#allocation2 + $0x10] sm:$0xff]
    %v34 = vld [vmem:[#allocation2 + $0x18] sm:$0xff]
    %v35 = vld [vmem:[#allocation2 + $0x20] sm:$0xff]
    %v36 = vld [vmem:[#allocation2 + $0x28] sm:$0xff]
    %v37 = vld [vmem:[#allocation2 + $0x30] sm:$0xff]
    %v38 = vld [vmem:[#allocation2 + $0x38] sm:$0xff]
    %v39 = vld [vmem:[#allocation2 + $0x40] sm:$0xff]
    %v40 = vld [vmem:[#allocation2 + $0x48] sm:$0xff]
    %v41 = vld [vmem:[#allocation2 + $0x50] sm:$0xff]
    %v42 = vld [vmem:[#allocation2 + $0x58] sm:$0xff]
    %v43 = vld [vmem:[#allocation2 + $0x60] sm:$0xff]
    %v44 = vld [vmem:[#allocation2 + $0x68] sm:$0xff]
    %v45 = vld [vmem:[#allocation2 + $0x70] sm:$0xff]
    %v46 = vld [vmem:[#allocation2 + $0x78] sm:$0xff]
    %v47 = vld [vmem:[#allocation2 + $0x80] sm:$0xff]
    %v48 = vld [vmem:[#allocation2 + $0x88] sm:$0xff]
    %v49 = vld [vmem:[#allocation2 + $0x90] sm:$0xff]
    %v50 = vld [vmem:[#allocation2 + $0x98] sm:$0xff]
    %v51 = vld [vmem:[#allocation2 + $0xa0] sm:$0xff]
    %v52 = vld [vmem:[#allocation2 + $0xa8] sm:$0xff]
    %v53 = vld [vmem:[#allocation2 + $0xb0] sm:$0xff]
    %v54 = vld [vmem:[#allocation2 + $0xb8] sm:$0xff]
    %v55 = vld [vmem:[#allocation2 + $0xc0] sm:$0xff]
    %v56 = vld [vmem:[#allocation2 + $0xc8] sm:$0xff]
    %v57 = vld [vmem:[#allocation2 + $0xd0] sm:$0xff]
    %v58 = vld [vmem:[#allocation2 + $0xd8] sm:$0xff]
    %v59 = vld [vmem:[#allocation2 + $0xe0] sm:$0xff]
    %v60 = vld [vmem:[#allocation2 + $0xe8] sm:$0xff]
    %v61 = vld [vmem:[#allocation2 + $0xf0] sm:$0xff]
    %v62 = vld [vmem:[#allocation2 + $0xf8] sm:$0xff]
    %v63 = vld [vmem:[%s2] sm:$0x3]
    %v65 = vlaneseq
    %v66 = vshrl.u32 %v65, 7
    %v67 = vsub.s32 0, %v66
    %v68 = vrot.slane %v63, %v67
    %v69 = vlaneseq
    %v70 = vshrl.u32 %v69, 7
    %v71 = vsub.s32 1, %v70
    %v72 = vrot.slane %v63, %v71
    %v77 = vunpack.c.l.b16 %v29
    %v78 = vunpack.c.h.b16 %v29
    %v79 = vunpack.c.l.b16 %v30
    %v80 = vunpack.c.h.b16 %v30
    %v81 = vpack.c.b16 %v79, %v77
    %v82 = vpack.c.b16 %v80, %v78
    %v117 = vunpack.c.l.b16 %v31
    %v118 = vunpack.c.h.b16 %v31
    %v119 = vunpack.c.l.b16 %v32
    %v120 = vunpack.c.h.b16 %v32
    %v121 = vunpack.c.l.b16 %v33
    %v122 = vunpack.c.h.b16 %v33
    %v123 = vunpack.c.l.b16 %v34
    %v124 = vunpack.c.h.b16 %v34
    %v125 = vunpack.c.l.b16 %v35
    %v126 = vunpack.c.h.b16 %v35
    %v127 = vunpack.c.l.b16 %v36
    %v128 = vunpack.c.h.b16 %v36
    %v129 = vunpack.c.l.b16 %v37
    %v130 = vunpack.c.h.b16 %v37
    %v131 = vunpack.c.l.b16 %v38
    %v132 = vunpack.c.h.b16 %v38
    %v133 = vunpack.c.l.b16 %v39
    %v134 = vunpack.c.h.b16 %v39
    %v135 = vunpack.c.l.b16 %v40
    %v136 = vunpack.c.h.b16 %v40
    %v137 = vunpack.c.l.b16 %v41
    %v138 = vunpack.c.h.b16 %v41
    %v139 = vunpack.c.l.b16 %v42
    %v140 = vunpack.c.h.b16 %v42
    %v141 = vunpack.c.l.b16 %v43
    %v142 = vunpack.c.h.b16 %v43
    %v143 = vunpack.c.l.b16 %v44
    %v144 = vunpack.c.h.b16 %v44
    %v145 = vunpack.c.l.b16 %v45
    %v146 = vunpack.c.h.b16 %v45
    %v147 = vunpack.c.l.b16 %v46
    %v148 = vunpack.c.h.b16 %v46
    %v149 = vunpack.c.l.b16 %v47
    %v150 = vunpack.c.h.b16 %v47
    %v151 = vunpack.c.l.b16 %v48
    %v152 = vunpack.c.h.b16 %v48
    %v153 = vunpack.c.l.b16 %v49
    %v154 = vunpack.c.h.b16 %v49
    %v155 = vunpack.c.l.b16 %v50
    %v156 = vunpack.c.h.b16 %v50
    %v157 = vunpack.c.l.b16 %v51
    %v158 = vunpack.c.h.b16 %v51
    %v159 = vunpack.c.l.b16 %v52
    %v160 = vunpack.c.h.b16 %v52
    %v161 = vunpack.c.l.b16 %v53
    %v162 = vunpack.c.h.b16 %v53
    %v163 = vunpack.c.l.b16 %v54
    %v164 = vunpack.c.h.b16 %v54
    %v165 = vunpack.c.l.b16 %v55
    %v166 = vunpack.c.h.b16 %v55
    %v167 = vunpack.c.l.b16 %v56
    %v168 = vunpack.c.h.b16 %v56
    %v169 = vunpack.c.l.b16 %v57
    %v170 = vunpack.c.h.b16 %v57
    %v171 = vunpack.c.l.b16 %v58
    %v172 = vunpack.c.h.b16 %v58
    %v173 = vunpack.c.l.b16 %v59
    %v174 = vunpack.c.h.b16 %v59
    %v175 = vunpack.c.l.b16 %v60
    %v176 = vunpack.c.h.b16 %v60
    %v177 = vunpack.c.l.b16 %v61
    %v178 = vunpack.c.h.b16 %v61
    %v179 = vunpack.c.l.b16 %v62
    %v180 = vunpack.c.h.b16 %v62
    %v181 = vpack.c.b16 %v119, %v117
    %v182 = vpack.c.b16 %v120, %v118
    %v183 = vpack.c.b16 %v123, %v121
    %v184 = vpack.c.b16 %v124, %v122
    %v185 = vpack.c.b16 %v127, %v125
    %v186 = vpack.c.b16 %v128, %v126
    %v187 = vpack.c.b16 %v131, %v129
    %v188 = vpack.c.b16 %v132, %v130
    %v189 = vpack.c.b16 %v135, %v133
    %v190 = vpack.c.b16 %v136, %v134
    %v191 = vpack.c.b16 %v139, %v137
    %v192 = vpack.c.b16 %v140, %v138
    %v193 = vpack.c.b16 %v143, %v141
    %v194 = vpack.c.b16 %v144, %v142
    %v195 = vpack.c.b16 %v147, %v145
    %v196 = vpack.c.b16 %v148, %v146
    %v197 = vpack.c.b16 %v151, %v149
    %v198 = vpack.c.b16 %v152, %v150
    %v199 = vpack.c.b16 %v155, %v153
    %v200 = vpack.c.b16 %v156, %v154
    %v201 = vpack.c.b16 %v159, %v157
    %v202 = vpack.c.b16 %v160, %v158
    %v203 = vpack.c.b16 %v163, %v161
    %v204 = vpack.c.b16 %v164, %v162
    %v205 = vpack.c.b16 %v167, %v165
    %v206 = vpack.c.b16 %v168, %v166
    %v207 = vpack.c.b16 %v171, %v169
    %v208 = vpack.c.b16 %v172, %v170
    %v209 = vpack.c.b16 %v175, %v173
    %v210 = vpack.c.b16 %v176, %v174
    %v211 = vpack.c.b16 %v179, %v177
    %v212 = vpack.c.b16 %v180, %v178
    %245 = vmatprep.subr.bf16.mxu0 %v182
    %246 = vmatpush1.bf16.msra.mxu0 %v181
    %247 = vmatprep.subr.bf16.mxu0 %v184
    %248 = vmatpush1.bf16.msra.mxu0 %v183
    %249 = vmatprep.subr.bf16.mxu0 %v186
    %250 = vmatpush1.bf16.msra.mxu0 %v185
    %251 = vmatprep.subr.bf16.mxu0 %v188
    %252 = vmatpush1.bf16.msra.mxu0 %v187
    %253 = vmatprep.subr.bf16.mxu0 %v190
    %254 = vmatpush1.bf16.msra.mxu0 %v189
    %255 = vmatprep.subr.bf16.mxu0 %v192
    %256 = vmatpush1.bf16.msra.mxu0 %v191
    %257 = vmatprep.subr.bf16.mxu0 %v194
    %258 = vmatpush1.bf16.msra.mxu0 %v193
    %259 = vmatprep.subr.bf16.mxu0 %v196
    %260 = vmatpush1.bf16.msra.mxu0 %v195
    %261 = vmatprep.subr.bf16.mxu0 %v198
    %262 = vmatpush1.bf16.msra.mxu0 %v197
    %263 = vmatprep.subr.bf16.mxu0 %v200
    %264 = vmatpush1.bf16.msra.mxu0 %v199
    %265 = vmatprep.subr.bf16.mxu0 %v202
    %266 = vmatpush1.bf16.msra.mxu0 %v201
    %267 = vmatprep.subr.bf16.mxu0 %v204
    %268 = vmatpush1.bf16.msra.mxu0 %v203
    %269 = vmatprep.subr.bf16.mxu0 %v206
    %270 = vmatpush1.bf16.msra.mxu0 %v205
    %271 = vmatprep.subr.bf16.mxu0 %v208
    %272 = vmatpush1.bf16.msra.mxu0 %v207
    %273 = vmatprep.subr.bf16.mxu0 %v210
    %274 = vmatpush1.bf16.msra.mxu0 %v209
    %275 = vmatprep.subr.bf16.mxu0 %v212
    %276 = vmatpush1.bf16.msra.mxu0 %v211
    %277 = vmatprep.mubr.bf16.mxu0 %v82
    %278 = vmatmul.mubr.bf16.gmra.mrb[0].mxu0 %v81
    %v279 = vpop.f32.mrb[0].mxu0
    %v280 = vadd.f32 %v68, %v279
    %v281 = vpop.f32.mrb[0].mxu0
    %v282 = vadd.f32 %v72, %v281
    %v283 = vpop.f32.mrb[0].mxu0
    %v284 = vadd.f32 %v68, %v283
    %v285 = vpop.f32.mrb[0].mxu0
    %v286 = vadd.f32 %v72, %v285
    %287 = vdwg.mxu0
    %288 = vst [vmem:[#allocation5] sm:$0xff] %v280
    %289 = vst [vmem:[#allocation5 + $0x8] sm:$0xff] %v282
    %290 = vst [vmem:[#allocation5 + $0x10] sm:$0xff] %v284
    %291 = vst [vmem:[#allocation5 + $0x18] sm:$0xff] %v286
    // Predicated region
    $region18: #{linear_block.1} parent=1 // pred_check
      _
    $region19: #{linear_block.1} parent=1 // pred_check_branch
      %293 = sbr.rel (0) target = $region21
    $region20: #{linear_block.1} parent=1 // pred_region
      %s295 = ssub.s32 512, 512
      %296 = vsyncadd [#allocation4], %s295
      %s297 = sshll.u32 [#allocation5], 4
      %s298 = int_to_ptr.vmem [resolvable:$true] %s297
      %303 = dma.vmem_to_hbm [thread:$0]  %s298, 512, %s3, [#allocation4], 256, 256, 16
    $region21: #{linear_block.1} parent=1 // pred_fallthru
      _
    // Predicated region
    $region22: #{linear_block.1} parent=1 // pred_check
      _
    $region23: #{linear_block.1} parent=1 // pred_check_branch
      %305 = sbr.rel (0) target = $region25
    $region24: #{linear_block.1} parent=1 // pred_region
      %306 = dma.done [#allocation4], 512
    $region25: #{linear_block.1} parent=1 // pred_fallthru
      _
    %307 = vsyncpa [#allocation3], 1
    %308 = vsyncpa [#allocation4], 1

</llo_original>
